<compile_context>
chip_gen: v6e
topology: v6e:2x2x1
jax: 0.10.0
libtpu: 0.0.40
codegen_flags: <defaults>
</compile_context>

<pallas_src>
import jax
import jax.numpy as jnp
from jax import lax
from jax.experimental import pallas as pl
from jax.experimental.pallas import tpu as pltpu


def _pick_b_tile(B, C, K, itemsize):
    """Largest batch tile keeping K double-buffered input tiles under ~8 MiB."""
    budget = 8 * 1024 * 1024
    bt = budget // max(1, 2 * K * C * itemsize)
    bt = max(8, min(int(bt), 512, B))
    if bt >= B:
        return B                       # single tile covers the whole batch
    return max(8, (bt // 8) * 8)       # multiple-of-8 sublane tile


def _make_kernel(K, B, B_TILE, C, weights, needs_mask):
    weights = [float(w) for w in weights]

    def kernel(*args):
        logit_refs = args[:K]
        tgt_ref = args[K]
        out_ref = args[K + 1]

        labels = tgt_ref[...]                                     # (B_TILE, 1) i32
        col = lax.broadcasted_iota(jnp.int32, (B_TILE, C), 1)
        onehot = col == labels                                    # (B_TILE, C) bool

        if needs_mask:
            t = pl.program_id(0)
            row = lax.broadcasted_iota(jnp.int32, (B_TILE, 1), 0)
            row_mask = (t * B_TILE + row) < B                     # (B_TILE, 1)

        total = jnp.zeros((B_TILE, 1), jnp.float32)
        for k in range(K):                                        # static unroll (K tiny)
            lg = logit_refs[k][...].astype(jnp.float32)           # cast after DMA
            if needs_mask:
                lg = jnp.where(row_mask, lg, 0.0)                 # keep pad rows finite
            m = jnp.max(lg, axis=-1, keepdims=True)
            z = lg - m                                            # shared by both sums
            lse_z = jnp.log(jnp.sum(jnp.exp(z), axis=-1, keepdims=True))
            picked_z = jnp.sum(jnp.where(onehot, z, 0.0), axis=-1, keepdims=True)
            total = total + weights[k] * (lse_z - picked_z)       # weighted CE rows

        if needs_mask:
            total = jnp.where(row_mask, total, 0.0)
        # lane-dense per-tile partial sum (sum of weighted per-row losses),
        # splat into a full (8,128) vreg so the store is a single unmasked vst.
        out_ref[...] = jnp.full((1, 8, 128), jnp.sum(total), dtype=jnp.float32)

    return kernel


def my_loss1(x, ys, target, num_exit_points):
    """Pallas implementation of MyLoss1.forward((x, ys), target)."""
    ys = list(ys)
    K = 1 + len(ys)
    B, C = x.shape
    logits = [x] + ys                                  # native dtype, no stack
    itemsize = max(l.dtype.itemsize for l in logits)

    B_TILE = _pick_b_tile(B, C, K, itemsize)
    num_tiles = (B + B_TILE - 1) // B_TILE
    needs_mask = (num_tiles * B_TILE != B)

    tgt = target.astype(jnp.int32).reshape(B, 1)

    # weight schedule: main loss -> 1.0, exit idx -> 1/(num_exit_points - idx + 1)
    weights = [1.0] + [1.0 / (num_exit_points - idx + 1) for idx in range(len(ys))]

    kernel = _make_kernel(K, B, B_TILE, C, weights, needs_mask)

    logit_specs = [
        pl.BlockSpec((B_TILE, C), lambda t: (t, 0)) for _ in range(K)
    ]
    tgt_spec = pl.BlockSpec((B_TILE, 1), lambda t: (t, 0))

    partials = pl.pallas_call(
        kernel,
        out_shape=jax.ShapeDtypeStruct((num_tiles, 8, 128), jnp.float32),
        grid_spec=pltpu.PrefetchScalarGridSpec(
            num_scalar_prefetch=0,
            grid=(num_tiles,),
            in_specs=logit_specs + [tgt_spec],
            out_specs=pl.BlockSpec((1, 8, 128), lambda t: (t, 0, 0)),
        ),
        compiler_params=pltpu.CompilerParams(
            dimension_semantics=("parallel",)),
    )(*logits, tgt)

    # tiny final reduction: sum of per-tile weighted row-loss sums, mean over B
    return jnp.sum(partials[:, 0, 0]) / B


def _reference_loss(x, ys, target, num_exit_points):
    """Pure-JAX reference matching nn.CrossEntropyLoss (mean) semantics."""
    def ce(logits, labels):
        logp = jax.nn.log_softmax(logits.astype(jnp.float32), axis=-1)
        picked = jnp.take_along_axis(logp, labels[:, None], axis=-1)[:, 0]
        return -jnp.mean(picked)

    loss = ce(x, target)
    bce = 0.0
    for idx, item in enumerate(ys):
        bce = bce + 1.0 / (num_exit_points - idx + 1) * ce(item, target)
    return loss + bce


if __name__ == "__main__":
    key = jax.random.PRNGKey(0)
    num_exit_points = 3

    # small shapes consistent with the module: batch=8, classes=32, 3 exits
    B, C = 8, 32
    k0, k1, k2, k3, kt = jax.random.split(key, 5)
    x = jax.random.normal(k0, (B, C), dtype=jnp.float32)
    ys = [
        jax.random.normal(k1, (B, C), dtype=jnp.float32),
        jax.random.normal(k2, (B, C), dtype=jnp.float32),
        jax.random.normal(k3, (B, C), dtype=jnp.float32),
    ]
    target = jax.random.randint(kt, (B,), 0, C, dtype=jnp.int32)

    out = jax.block_until_ready(my_loss1(x, ys, target, num_exit_points))

    ref = _reference_loss(x, ys, target, num_exit_points)
    assert jnp.allclose(out, ref, rtol=1e-5, atol=1e-5), (out, ref)

    # TODO(synk): nn.CrossEntropyLoss extras (ignore_index, label smoothing,
    # class weights) are not modeled -- not used by the reference module.
    print("KERNEL_OK")
</pallas_src>

<mosaic_0001>
module attributes {stable_mosaic.version = 11 : i64} {
  func.func @kernel(%arg0: i32, %arg1: memref<8x32xf32, #tpu.memory_space<vmem>>, %arg2: memref<8x32xf32, #tpu.memory_space<vmem>>, %arg3: memref<8x32xf32, #tpu.memory_space<vmem>>, %arg4: memref<8x32xf32, #tpu.memory_space<vmem>>, %arg5: memref<8x1xi32, #tpu.memory_space<vmem>>, %arg6: memref<1x8x128xf32, #tpu.memory_space<vmem>>) attributes {dimension_semantics = [#tpu.dimension_semantics<parallel>], iteration_bounds = array<i64: 1>, scalar_prefetch = 0 : i64, scratch_operands = 0 : i64, tpu.core_type = #tpu.core_type<tc>, window_params = [{transform_indices = @transform_0, window_bounds = array<i64: 8, 32>}, {transform_indices = @transform_1, window_bounds = array<i64: 8, 32>}, {transform_indices = @transform_2, window_bounds = array<i64: 8, 32>}, {transform_indices = @transform_3, window_bounds = array<i64: 8, 32>}, {transform_indices = @transform_4, window_bounds = array<i64: 8, 1>}, {transform_indices = @transform_5, window_bounds = array<i64: 1, 8, 128>}]} {
    %c0 = arith.constant 0 : index
    %c0_0 = arith.constant 0 : index
    %0 = vector.load %arg5[%c0, %c0_0] : memref<8x1xi32, #tpu.memory_space<vmem>>, vector<8x1xi32>
    %1 = tpu.iota {dimensions = array<i32: 1>} : vector<8x32xi32>
    %2 = vector.broadcast %0 : vector<8x1xi32> to vector<8x32xi32>
    %3 = arith.cmpi eq, %1, %2 : vector<8x32xi32>
    %cst = arith.constant 0.000000e+00 : f32
    %4 = vector.broadcast %cst : f32 to vector<8x1xf32>
    %c0_1 = arith.constant 0 : index
    %c0_2 = arith.constant 0 : index
    %5 = vector.load %arg1[%c0_1, %c0_2] : memref<8x32xf32, #tpu.memory_space<vmem>>, vector<8x32xf32>
    %cst_3 = arith.constant dense<0xFF800000> : vector<8xf32>
    %6 = vector.multi_reduction <maximumf>, %5, %cst_3 [1] : vector<8x32xf32> to vector<8xf32>
    %7 = vector.shape_cast %6 : vector<8xf32> to vector<8x1xf32>
    %8 = vector.broadcast %7 : vector<8x1xf32> to vector<8x32xf32>
    %9 = arith.subf %5, %8 : vector<8x32xf32>
    %10 = math.exp %9 : vector<8x32xf32>
    %cst_4 = arith.constant dense<0.000000e+00> : vector<8xf32>
    %11 = vector.multi_reduction <add>, %10, %cst_4 [1] : vector<8x32xf32> to vector<8xf32>
    %12 = vector.shape_cast %11 : vector<8xf32> to vector<8x1xf32>
    %13 = math.log %12 : vector<8x1xf32>
    %cst_5 = arith.constant 0.000000e+00 : f32
    %14 = vector.broadcast %cst_5 : f32 to vector<8x32xf32>
    %15 = arith.select %3, %9, %14 : vector<8x32xi1>, vector<8x32xf32>
    %cst_6 = arith.constant dense<0.000000e+00> : vector<8xf32>
    %16 = vector.multi_reduction <add>, %15, %cst_6 [1] : vector<8x32xf32> to vector<8xf32>
    %17 = vector.shape_cast %16 : vector<8xf32> to vector<8x1xf32>
    %18 = arith.subf %13, %17 : vector<8x1xf32>
    %cst_7 = arith.constant 1.000000e+00 : f32
    %19 = vector.broadcast %cst_7 : f32 to vector<8x1xf32>
    %20 = arith.mulf %19, %18 : vector<8x1xf32>
    %21 = arith.addf %4, %20 : vector<8x1xf32>
    %c0_8 = arith.constant 0 : index
    %c0_9 = arith.constant 0 : index
    %22 = vector.load %arg2[%c0_8, %c0_9] : memref<8x32xf32, #tpu.memory_space<vmem>>, vector<8x32xf32>
    %cst_10 = arith.constant dense<0xFF800000> : vector<8xf32>
    %23 = vector.multi_reduction <maximumf>, %22, %cst_10 [1] : vector<8x32xf32> to vector<8xf32>
    %24 = vector.shape_cast %23 : vector<8xf32> to vector<8x1xf32>
    %25 = vector.broadcast %24 : vector<8x1xf32> to vector<8x32xf32>
    %26 = arith.subf %22, %25 : vector<8x32xf32>
    %27 = math.exp %26 : vector<8x32xf32>
    %cst_11 = arith.constant dense<0.000000e+00> : vector<8xf32>
    %28 = vector.multi_reduction <add>, %27, %cst_11 [1] : vector<8x32xf32> to vector<8xf32>
    %29 = vector.shape_cast %28 : vector<8xf32> to vector<8x1xf32>
    %30 = math.log %29 : vector<8x1xf32>
    %cst_12 = arith.constant 0.000000e+00 : f32
    %31 = vector.broadcast %cst_12 : f32 to vector<8x32xf32>
    %32 = arith.select %3, %26, %31 : vector<8x32xi1>, vector<8x32xf32>
    %cst_13 = arith.constant dense<0.000000e+00> : vector<8xf32>
    %33 = vector.multi_reduction <add>, %32, %cst_13 [1] : vector<8x32xf32> to vector<8xf32>
    %34 = vector.shape_cast %33 : vector<8xf32> to vector<8x1xf32>
    %35 = arith.subf %30, %34 : vector<8x1xf32>
    %cst_14 = arith.constant 2.500000e-01 : f32
    %36 = vector.broadcast %cst_14 : f32 to vector<8x1xf32>
    %37 = arith.mulf %36, %35 : vector<8x1xf32>
    %38 = arith.addf %21, %37 : vector<8x1xf32>
    %c0_15 = arith.constant 0 : index
    %c0_16 = arith.constant 0 : index
    %39 = vector.load %arg3[%c0_15, %c0_16] : memref<8x32xf32, #tpu.memory_space<vmem>>, vector<8x32xf32>
    %cst_17 = arith.constant dense<0xFF800000> : vector<8xf32>
    %40 = vector.multi_reduction <maximumf>, %39, %cst_17 [1] : vector<8x32xf32> to vector<8xf32>
    %41 = vector.shape_cast %40 : vector<8xf32> to vector<8x1xf32>
    %42 = vector.broadcast %41 : vector<8x1xf32> to vector<8x32xf32>
    %43 = arith.subf %39, %42 : vector<8x32xf32>
    %44 = math.exp %43 : vector<8x32xf32>
    %cst_18 = arith.constant dense<0.000000e+00> : vector<8xf32>
    %45 = vector.multi_reduction <add>, %44, %cst_18 [1] : vector<8x32xf32> to vector<8xf32>
    %46 = vector.shape_cast %45 : vector<8xf32> to vector<8x1xf32>
    %47 = math.log %46 : vector<8x1xf32>
    %cst_19 = arith.constant 0.000000e+00 : f32
    %48 = vector.broadcast %cst_19 : f32 to vector<8x32xf32>
    %49 = arith.select %3, %43, %48 : vector<8x32xi1>, vector<8x32xf32>
    %cst_20 = arith.constant dense<0.000000e+00> : vector<8xf32>
    %50 = vector.multi_reduction <add>, %49, %cst_20 [1] : vector<8x32xf32> to vector<8xf32>
    %51 = vector.shape_cast %50 : vector<8xf32> to vector<8x1xf32>
    %52 = arith.subf %47, %51 : vector<8x1xf32>
    %cst_21 = arith.constant 0.333333343 : f32
    %53 = vector.broadcast %cst_21 : f32 to vector<8x1xf32>
    %54 = arith.mulf %53, %52 : vector<8x1xf32>
    %55 = arith.addf %38, %54 : vector<8x1xf32>
    %c0_22 = arith.constant 0 : index
    %c0_23 = arith.constant 0 : index
    %56 = vector.load %arg4[%c0_22, %c0_23] : memref<8x32xf32, #tpu.memory_space<vmem>>, vector<8x32xf32>
    %cst_24 = arith.constant dense<0xFF800000> : vector<8xf32>
    %57 = vector.multi_reduction <maximumf>, %56, %cst_24 [1] : vector<8x32xf32> to vector<8xf32>
    %58 = vector.shape_cast %57 : vector<8xf32> to vector<8x1xf32>
    %59 = vector.broadcast %58 : vector<8x1xf32> to vector<8x32xf32>
    %60 = arith.subf %56, %59 : vector<8x32xf32>
    %61 = math.exp %60 : vector<8x32xf32>
    %cst_25 = arith.constant dense<0.000000e+00> : vector<8xf32>
    %62 = vector.multi_reduction <add>, %61, %cst_25 [1] : vector<8x32xf32> to vector<8xf32>
    %63 = vector.shape_cast %62 : vector<8xf32> to vector<8x1xf32>
    %64 = math.log %63 : vector<8x1xf32>
    %cst_26 = arith.constant 0.000000e+00 : f32
    %65 = vector.broadcast %cst_26 : f32 to vector<8x32xf32>
    %66 = arith.select %3, %60, %65 : vector<8x32xi1>, vector<8x32xf32>
    %cst_27 = arith.constant dense<0.000000e+00> : vector<8xf32>
    %67 = vector.multi_reduction <add>, %66, %cst_27 [1] : vector<8x32xf32> to vector<8xf32>
    %68 = vector.shape_cast %67 : vector<8xf32> to vector<8x1xf32>
    %69 = arith.subf %64, %68 : vector<8x1xf32>
    %cst_28 = arith.constant 5.000000e-01 : f32
    %70 = vector.broadcast %cst_28 : f32 to vector<8x1xf32>
    %71 = arith.mulf %70, %69 : vector<8x1xf32>
    %72 = arith.addf %55, %71 : vector<8x1xf32>
    %73 = vector.shape_cast %72 : vector<8x1xf32> to vector<1x8x1xf32>
    %cst_29 = arith.constant dense<0.000000e+00> : vector<1xf32>
    %74 = vector.multi_reduction <add>, %73, %cst_29 [1, 2] : vector<1x8x1xf32> to vector<1xf32>
    %75 = vector.shape_cast %74 : vector<1xf32> to vector<1x1x1xf32>
    %76 = vector.extract %75[0, 0, 0] : f32 from vector<1x1x1xf32>
    %77 = vector.broadcast %76 : f32 to vector<1x8x128xf32>
    %c0_30 = arith.constant 0 : index
    %c0_31 = arith.constant 0 : index
    %c0_32 = arith.constant 0 : index
    %78 = vector.load %arg6[%c0_30, %c0_31, %c0_32] : memref<1x8x128xf32, #tpu.memory_space<vmem>>, vector<1x8x128xf32>
    tpu.vector_store %arg6[%c0_30, %c0_31, %c0_32], %77 {strides = array<i32>} : memref<1x8x128xf32, #tpu.memory_space<vmem>>, vector<1x8x128xf32>,
    return
  }
  func.func @transform_0(%arg0: i32) -> (i32, i32) {
    %c0_i32 = arith.constant 0 : i32
    %c0_i32_0 = arith.constant 0 : i32
    return %arg0, %c0_i32 : i32, i32
  }
  func.func @transform_1(%arg0: i32) -> (i32, i32) {
    %c0_i32 = arith.constant 0 : i32
    %c0_i32_0 = arith.constant 0 : i32
    return %arg0, %c0_i32 : i32, i32
  }
  func.func @transform_2(%arg0: i32) -> (i32, i32) {
    %c0_i32 = arith.constant 0 : i32
    %c0_i32_0 = arith.constant 0 : i32
    return %arg0, %c0_i32 : i32, i32
  }
  func.func @transform_3(%arg0: i32) -> (i32, i32) {
    %c0_i32 = arith.constant 0 : i32
    %c0_i32_0 = arith.constant 0 : i32
    return %arg0, %c0_i32 : i32, i32
  }
  func.func @transform_4(%arg0: i32) -> (i32, i32) {
    %c0_i32 = arith.constant 0 : i32
    %c0_i32_0 = arith.constant 0 : i32
    return %arg0, %c0_i32 : i32, i32
  }
  func.func @transform_5(%arg0: i32) -> (i32, i32, i32) {
    %c0_i32 = arith.constant 0 : i32
    %c0_i32_0 = arith.constant 0 : i32
    %c0_i32_1 = arith.constant 0 : i32
    return %arg0, %c0_i32, %c0_i32_0 : i32, i32, i32
  }
}

</mosaic_0001>

<llo_original>
// kernel: tpu_custom_call.1
$region0: #{tpu_custom_call.1}
  #allocation0 [shape = 'u32[]', space=smem, size = 0x4, offset = 0x4, fixed_abs, tag = 'smem constant byte address 0x4 - core index']
  #allocation1 [shape = 'u32[144,128]{1,0:T(1,128)}', space=vmem, size = 0x12000, scoped, tag = 'internal scratch']
  %s0 = inlined_call_operand.vmem [shape: f32[8,32], index: 0, kind: input, shape index: {}]
  %s1 = inlined_call_operand.hbm [shape: f32[8,32], index: 1, kind: input, shape index: {}]
  %s2 = inlined_call_operand.hbm [shape: f32[8,32], index: 2, kind: input, shape index: {}]
  %s3 = inlined_call_operand.hbm [shape: f32[8,32], index: 3, kind: input, shape index: {}]
  %s4 = inlined_call_operand.vmem [shape: s32[8,1], index: 4, kind: input, shape index: {}]
  %s5 = inlined_call_operand.hbm [shape: f32[1,8,128], index: 5, kind: output, shape index: {}]
  %s6 = sld [smem:[#allocation0]]
  $region42: #{tpu_custom_call.1} parent=0
    _
  %s8 = ssub.s32 1, %s6
  %s9 = scalar_select 0, %s8, %s6
  $region1: #{tpu_custom_call.1} parent=0
    #allocation2 [shape = 'u8[4096]{0}', space=vmem, size = 0x1000, scoped, tag = 'input window, operand 1, single buffered']
    #allocation3 [shape = 's32[1]{0}', space=sflag, size = 0x4, scoped, tag = 'scoped memory for tpu_custom_call.1']
    #allocation4 [shape = 's32[1]{0}', space=sflag, size = 0x4, scoped, tag = 'scoped memory for tpu_custom_call.1']
    #allocation5 [shape = 'u8[4096]{0}', space=vmem, size = 0x1000, scoped, tag = 'input window, operand 2, single buffered']
    #allocation6 [shape = 's32[1]{0}', space=sflag, size = 0x4, scoped, tag = 'scoped memory for tpu_custom_call.1']
    #allocation7 [shape = 'u8[4096]{0}', space=vmem, size = 0x1000, scoped, tag = 'input window, operand 3, single buffered']
    #allocation8 [shape = 'u8[4096]{0}', space=vmem, size = 0x1000, scoped, tag = 'output window, operand 0, single buffered']
    %10 = vsyncpa [#allocation3], 0
    %11 = vsyncpa [#allocation6], 0
    %12 = vsyncpa [#allocation4], 0
    // Predicated region
    $region2: #{tpu_custom_call.1} parent=1 // pred_check
      _
    $region3: #{tpu_custom_call.1} parent=1 // pred_check_branch
      %14 = sbr.rel (0) target = $region5
    $region4: #{tpu_custom_call.1} parent=1 // pred_region
      _
    $region5: #{tpu_custom_call.1} parent=1 // pred_fallthru
      _
    // Predicated region
    $region6: #{tpu_custom_call.1} parent=1 // pred_check
      _
    $region7: #{tpu_custom_call.1} parent=1 // pred_check_branch
      %16 = sbr.rel (0) target = $region9
    $region8: #{tpu_custom_call.1} parent=1 // pred_region
      %s18 = ssub.s32 128, 128
      %19 = vsyncadd [#allocation3], %s18
      %s21 = sshll.u32 [#allocation2], 4
      %s22 = int_to_ptr.vmem [resolvable:$true] %s21
      %24 = dma.hbm_to_vmem [thread:$0]  %s1, 128, %s22, [#allocation3]
    $region9: #{tpu_custom_call.1} parent=1 // pred_fallthru
      _
    // Predicated region
    $region10: #{tpu_custom_call.1} parent=1 // pred_check
      _
    $region11: #{tpu_custom_call.1} parent=1 // pred_check_branch
      %26 = sbr.rel (0) target = $region13
    $region12: #{tpu_custom_call.1} parent=1 // pred_region
      %s28 = ssub.s32 128, 128
      %29 = vsyncadd [#allocation6], %s28
      %s31 = sshll.u32 [#allocation5], 4
      %s32 = int_to_ptr.vmem [resolvable:$true] %s31
      %34 = dma.hbm_to_vmem [thread:$0]  %s2, 128, %s32, [#allocation6]
    $region13: #{tpu_custom_call.1} parent=1 // pred_fallthru
      _
    // Predicated region
    $region14: #{tpu_custom_call.1} parent=1 // pred_check
      _
    $region15: #{tpu_custom_call.1} parent=1 // pred_check_branch
      %36 = sbr.rel (0) target = $region17
    $region16: #{tpu_custom_call.1} parent=1 // pred_region
      %s38 = ssub.s32 128, 128
      %39 = vsyncadd [#allocation6], %s38
      %s41 = sshll.u32 [#allocation7], 4
      %s42 = int_to_ptr.vmem [resolvable:$true] %s41
      %44 = dma.hbm_to_vmem [thread:$0]  %s3, 128, %s42, [#allocation6]
    $region17: #{tpu_custom_call.1} parent=1 // pred_fallthru
      _
    // Predicated region
    $region18: #{tpu_custom_call.1} parent=1 // pred_check
      _
    $region19: #{tpu_custom_call.1} parent=1 // pred_check_branch
      %46 = sbr.rel (0) target = $region21
    $region20: #{tpu_custom_call.1} parent=1 // pred_region
      _
    $region21: #{tpu_custom_call.1} parent=1 // pred_fallthru
      _
    // Predicated region
    $region22: #{tpu_custom_call.1} parent=1 // pred_check
      _
    $region23: #{tpu_custom_call.1} parent=1 // pred_check_branch
      %48 = sbr.rel (0) target = $region25
    $region24: #{tpu_custom_call.1} parent=1 // pred_region
      %49 = dma.done [#allocation3], 128
    $region25: #{tpu_custom_call.1} parent=1 // pred_fallthru
      _
    // Predicated region
    $region26: #{tpu_custom_call.1} parent=1 // pred_check
      _
    $region27: #{tpu_custom_call.1} parent=1 // pred_check_branch
      %51 = sbr.rel (0) target = $region29
    $region28: #{tpu_custom_call.1} parent=1 // pred_region
      %52 = dma.done [#allocation6], 128
    $region29: #{tpu_custom_call.1} parent=1 // pred_fallthru
      _
    // Predicated region
    $region30: #{tpu_custom_call.1} parent=1 // pred_check
      _
    $region31: #{tpu_custom_call.1} parent=1 // pred_check_branch
      %54 = sbr.rel (0) target = $region33
    $region32: #{tpu_custom_call.1} parent=1 // pred_region
      %55 = dma.done [#allocation6], 128
    $region33: #{tpu_custom_call.1} parent=1 // pred_fallthru
      _
    %v56 = vld [vmem:[%s4] sm:$0xff]
    %v57 = vlaneseq
    %v58 = vand.u32 %v57, 127
    %59 = vset.pattern.permute.xlu0 0
    %60 = vperm.xlu0 %59, %v56
    %v61 = vpop.permute.xlu0 %60
    %vm62 = vcmp.eq.s32.totalorder %v58, %v61
    %v63 = vld [vmem:[%s0] sm:$0xff]
    %vm64 = vcmask 261120
    %v65 = vsel %vm64, %v63, -inf
    %66 = vmax.xlane.f32.xlu0 %v65
    %v67 = vpop.xlane.xlu0 %66
    %v68 = vsub.f32 %v63, %v67
    %v69 = vmul.f32 %v68, 1.442695
    %v70 = vpow.pop %v69
    %v71 = vsel %vm64, %v70, 0.0
    %72 = vadd.xlane.f32.xlu0 %v71
    %v73 = vpop.xlane.xlu0 %72
    %v74 = vlog2.pop %v73
    %v75 = vmul.f32 %v74, 0.6931472
    %v76 = vsel %vm62, %v68, 0.0
    %v77 = vsel %vm64, %v76, 0.0
    %78 = vadd.xlane.f32.xlu0 %v77
    %v79 = vpop.xlane.xlu0 %78
    %v80 = vsub.f32 %v75, %v79
    %v81 = vadd.f32 %v80, 0.0
    %v82 = vld [vmem:[#allocation2] sm:$0xff]
    %v83 = vsel %vm64, %v82, -inf
    %84 = vmax.xlane.f32.xlu0 %v83
    %v85 = vpop.xlane.xlu0 %84
    %v86 = vsub.f32 %v82, %v85
    %v87 = vmul.f32 %v86, 1.442695
    %v88 = vpow.pop %v87
    %v89 = vsel %vm64, %v88, 0.0
    %90 = vadd.xlane.f32.xlu0 %v89
    %v91 = vpop.xlane.xlu0 %90
    %v92 = vlog2.pop %v91
    %v93 = vmul.f32 %v92, 0.6931472
    %v94 = vsel %vm62, %v86, 0.0
    %v95 = vsel %vm64, %v94, 0.0
    %96 = vadd.xlane.f32.xlu0 %v95
    %v97 = vpop.xlane.xlu0 %96
    %v98 = vsub.f32 %v93, %v97
    %v99 = vmul.f32 %v98, 0.25
    %v100 = vadd.f32 %v81, %v99
    %v101 = vld [vmem:[#allocation5] sm:$0xff]
    %v102 = vsel %vm64, %v101, -inf
    %103 = vmax.xlane.f32.xlu0 %v102
    %v104 = vpop.xlane.xlu0 %103
    %v105 = vsub.f32 %v101, %v104
    %v106 = vmul.f32 %v105, 1.442695
    %v107 = vpow.pop %v106
    %v108 = vsel %vm64, %v107, 0.0
    %109 = vadd.xlane.f32.xlu0 %v108
    %v110 = vpop.xlane.xlu0 %109
    %v111 = vlog2.pop %v110
    %v112 = vmul.f32 %v111, 0.6931472
    %v113 = vsel %vm62, %v105, 0.0
    %v114 = vsel %vm64, %v113, 0.0
    %115 = vadd.xlane.f32.xlu0 %v114
    %v116 = vpop.xlane.xlu0 %115
    %v117 = vsub.f32 %v112, %v116
    %v118 = vmul.f32 %v117, 0.33333334
    %v119 = vadd.f32 %v100, %v118
    %v120 = vld [vmem:[#allocation7] sm:$0xff]
    %v121 = vsel %vm64, %v120, -inf
    %122 = vmax.xlane.f32.xlu0 %v121
    %v123 = vpop.xlane.xlu0 %122
    %v124 = vsub.f32 %v120, %v123
    %v125 = vmul.f32 %v124, 1.442695
    %v126 = vpow.pop %v125
    %v127 = vsel %vm64, %v126, 0.0
    %128 = vadd.xlane.f32.xlu0 %v127
    %v129 = vpop.xlane.xlu0 %128
    %v130 = vlog2.pop %v129
    %v131 = vmul.f32 %v130, 0.6931472
    %v132 = vsel %vm62, %v124, 0.0
    %v133 = vsel %vm64, %v132, 0.0
    %134 = vadd.xlane.f32.xlu0 %v133
    %v135 = vpop.xlane.xlu0 %134
    %v136 = vsub.f32 %v131, %v135
    %v137 = vmul.f32 %v136, 0.5
    %v138 = vadd.f32 %v119, %v137
    %vm139 = vcmask 7168
    %v140 = vsel %vm139, %v138, 0.0
    %141 = vadd.xlane.f32.xlu0 %v140
    %v142 = vpop.xlane.xlu0 %141
    %v143 = vrot.slane %v142, 4
    %v144 = vadd.f32 %v142, %v143
    %v145 = vrot.slane %v144, 2
    %v146 = vadd.f32 %v144, %v145
    %v147 = vrot.slane %v146, 1
    %v148 = vadd.f32 %v146, %v147
    %s149 = vtos %v148
    %v150 = vstv %s149
    %151 = vst [vmem:[#allocation8] sm:$0xff] %v150
    // Predicated region
    $region34: #{tpu_custom_call.1} parent=1 // pred_check
      _
    $region35: #{tpu_custom_call.1} parent=1 // pred_check_branch
      %153 = sbr.rel (0) target = $region37
    $region36: #{tpu_custom_call.1} parent=1 // pred_region
      %s155 = ssub.s32 128, 128
      %156 = vsyncadd [#allocation4], %s155
      %s158 = sshll.u32 [#allocation8], 4
      %s159 = int_to_ptr.vmem [resolvable:$true] %s158
      %161 = dma.vmem_to_hbm [thread:$0]  %s159, 128, %s5, [#allocation4]
    $region37: #{tpu_custom_call.1} parent=1 // pred_fallthru
      _
    // Predicated region
    $region38: #{tpu_custom_call.1} parent=1 // pred_check
      _
    $region39: #{tpu_custom_call.1} parent=1 // pred_check_branch
      %163 = sbr.rel (0) target = $region41
    $region40: #{tpu_custom_call.1} parent=1 // pred_region
      %164 = dma.done [#allocation4], 128
    $region41: #{tpu_custom_call.1} parent=1 // pred_fallthru
      _
    %165 = vsyncpa [#allocation3], 1
    %166 = vsyncpa [#allocation6], 1
    %167 = vsyncpa [#allocation4], 1

</llo_original>
